<compile_context>
chip_gen: v5e
topology: v5e:2x2
jax: 0.10.0
libtpu: 0.0.40
codegen_flags: <defaults>
</compile_context>

<pallas_src>
import functools
import math

import jax
import jax.numpy as jnp
from jax.experimental import pallas as pl
from jax.experimental.pallas import tpu as pltpu


# ---------------------------------------------------------------------------
# Kernel A: flash attention per (batch, head, q-tile), online softmax over k-tiles
# ---------------------------------------------------------------------------
def _flash_attn_kernel(q_ref, k_ref, v_ref, bias_ref, o_ref,
                       m_ref, l_ref, acc_ref, *, scaling):
    ki = pl.program_id(3)

    @pl.when(ki == 0)
    def _init():
        m_ref[...] = jnp.full_like(m_ref, -1e30)     # finite -> no exp(-inf - -inf) NaN
        l_ref[...] = jnp.zeros_like(l_ref)
        acc_ref[...] = jnp.zeros_like(acc_ref)

    # Keep MXU operands in the input dtype (bf16 in production); accumulate in f32.
    q = q_ref[0, 0] * scaling                        # (tq, D3)
    k = k_ref[0, 0]                                  # (tk, D3)
    v = v_ref[0, 0]                                  # (tk, D3)

    s = jax.lax.dot_general(q, k, (((1,), (1,)), ((), ())),
                            preferred_element_type=jnp.float32)      # (tq, tk) f32
    s = s + bias_ref[0, 0].astype(jnp.float32)       # key-padding mask already folded in

    m_prev = m_ref[...]                              # (tq, 1)
    m_new = jnp.maximum(m_prev, jnp.max(s, axis=-1, keepdims=True))
    alpha = jnp.exp(m_prev - m_new)
    p = jnp.exp(s - m_new)                           # unnormalized probabilities (f32)

    l_ref[...] = alpha * l_ref[...] + jnp.sum(p, axis=-1, keepdims=True)
    acc_ref[...] = alpha * acc_ref[...] + jnp.dot(
        p.astype(v.dtype), v, preferred_element_type=jnp.float32)
    m_ref[...] = m_new

    @pl.when(ki == pl.num_programs(3) - 1)
    def _finalize():
        # Deferred softmax normalization: one reciprocal per row instead of T*S divides.
        inv = pl.reciprocal(l_ref[...], approx=True)
        o_ref[0, 0] = (acc_ref[...] * inv).astype(o_ref.dtype)


# ---------------------------------------------------------------------------
# Kernel B: smooth equivariant layer-norm + out_proj (Linear, no bias), token-tiled
# ---------------------------------------------------------------------------
def _ln_proj_kernel(x_ref, wln_ref, wout_t_ref, o_ref, *, eps):
    pos = x_ref.shape[2]
    # Per-component (tq, C) slabs loaded directly from the ref -> clean 2D MXU shapes.
    xs = [x_ref[0, :, p, :] for p in range(pos)]

    # Smooth equivariant norm: mean over channels of (sum over components of x^2).
    ssq = None
    for xp in xs:
        xf = xp.astype(jnp.float32)
        ssq = xf * xf if ssq is None else ssq + xf * xf               # (tq, C)
    inv = jax.lax.rsqrt(jnp.mean(ssq, axis=-1, keepdims=True) + eps)  # (tq, 1)

    w = wln_ref[0].astype(jnp.float32)               # (C,)
    w_t = wout_t_ref[...]                            # (C_in, C_out), resident across grid

    for p, xp in enumerate(xs):
        xo = (xp.astype(jnp.float32) * w[None, :]) * inv              # (tq, C) f32
        y = jnp.dot(xo.astype(w_t.dtype), w_t,
                    preferred_element_type=jnp.float32)               # (tq, C) on MXU
        o_ref[0, :, p, :] = y.astype(o_ref.dtype)


# ---------------------------------------------------------------------------
# Wrapper
# ---------------------------------------------------------------------------
def _pick_tile(n, target, quantum):
    """Largest multiple of `quantum` that is <= target and divides n; else full n."""
    if n <= target:
        return n
    t = (target // quantum) * quantum
    while t >= quantum:
        if n % t == 0:
            return t
        t -= quantum
    return n


def equivariant_attention(q, k, v, attn_bias, key_padding_mask, params, *,
                          head_dim, d_tilde=1, ln_eps=1e-3,
                          q_tile=256, k_tile=512, ln_tile=128):
    bsz, tgt, pos, C = q.shape
    src = k.shape[1]
    H = C // head_dim
    D3 = pos * head_dim
    scaling = (head_dim / (d_tilde * 3)) ** 0.5 / head_dim
    out_dtype = q.dtype                              # keep intermediates in input dtype

    def to_heads(x, L):
        # (B, L, 3, C) -> (B, H, L, 3*head_dim)   (matches torch reshape/permute chain)
        return jnp.transpose(x.reshape(bsz, L, pos, H, head_dim),
                             (0, 3, 1, 2, 4)).reshape(bsz, H, L, D3)

    qh, kh, vh = to_heads(q, tgt), to_heads(k, src), to_heads(v, src)

    # Fold key padding mask into the bias once (large finite negative, NaN-safe),
    # dropping the mask stream + per-element select from the kernel.
    bias = attn_bias.astype(jnp.float32)
    if key_padding_mask is not None:
        bias = bias + jnp.where(key_padding_mask, -1e30, 0.0)[:, None, None, :]

    tq = _pick_tile(tgt, q_tile, 8)
    tk = _pick_tile(src, k_tile, 128)
    nq, nk = tgt // tq, src // tk

    attn_out = pl.pallas_call(
        functools.partial(_flash_attn_kernel, scaling=scaling),
        out_shape=jax.ShapeDtypeStruct((bsz, H, tgt, D3), out_dtype),
        grid=(bsz, H, nq, nk),                       # reduction axis (k-tiles) last
        in_specs=[
            pl.BlockSpec((1, 1, tq, D3), lambda b, h, qi, ki: (b, h, qi, 0)),
            pl.BlockSpec((1, 1, tk, D3), lambda b, h, qi, ki: (b, h, ki, 0)),
            pl.BlockSpec((1, 1, tk, D3), lambda b, h, qi, ki: (b, h, ki, 0)),
            pl.BlockSpec((1, 1, tq, tk), lambda b, h, qi, ki: (b, h, qi, ki)),
        ],
        out_specs=pl.BlockSpec((1, 1, tq, D3), lambda b, h, qi, ki: (b, h, qi, 0)),
        scratch_shapes=[
            pltpu.VMEM((tq, 1), jnp.float32),        # running max
            pltpu.VMEM((tq, 1), jnp.float32),        # running sum
            pltpu.VMEM((tq, D3), jnp.float32),       # unnormalized output accumulator
        ],
        compiler_params=pltpu.CompilerParams(
            dimension_semantics=("parallel", "parallel", "parallel", "arbitrary")),
    )(qh, kh, vh, bias)

    # Head recombination: (B, H, T, 3*hd) -> (B, T, 3, C)  (matches torch reshape chain).
    attn_r = (attn_out.transpose(0, 2, 1, 3)
              .reshape(bsz, tgt, H, pos, head_dim)
              .transpose(0, 1, 3, 2, 4)
              .reshape(bsz, tgt, pos, C))

    wln = params["ln_weight"].reshape(1, C)
    wout_t = params["out_proj_weight"].T             # torch (out, in) -> (in, out)

    tq2 = _pick_tile(tgt, ln_tile, 1)
    nq2 = tgt // tq2

    y = pl.pallas_call(
        functools.partial(_ln_proj_kernel, eps=ln_eps),
        out_shape=jax.ShapeDtypeStruct((bsz, tgt, pos, C), out_dtype),
        grid=(bsz, nq2),
        in_specs=[
            pl.BlockSpec((1, tq2, pos, C), lambda b, i: (b, i, 0, 0)),
            pl.BlockSpec((1, C), lambda b, i: (0, 0)),
            pl.BlockSpec((C, C), lambda b, i: (0, 0)),
        ],
        out_specs=pl.BlockSpec((1, tq2, pos, C), lambda b, i: (b, i, 0, 0)),
        compiler_params=pltpu.CompilerParams(
            dimension_semantics=("parallel", "parallel")),
    )(attn_r, wln, wout_t)
    return y


# ---------------------------------------------------------------------------
# Pure-JAX reference (same math, for correctness check)
# ---------------------------------------------------------------------------
def reference(q, k, v, attn_bias, key_padding_mask, params, *,
              head_dim, d_tilde=1, ln_eps=1e-3):
    bsz, tgt, pos, C = q.shape
    src = k.shape[1]
    H = C // head_dim
    scaling = (head_dim / (d_tilde * 3)) ** 0.5 / head_dim

    def to_heads(x, L):
        return jnp.transpose(x.reshape(bsz, L, pos, H, head_dim),
                             (0, 3, 1, 2, 4)).reshape(bsz, H, L, pos * head_dim)

    qh, kh, vh = to_heads(q * scaling, tgt), to_heads(k, src), to_heads(v, src)
    s = jnp.einsum("bhtd,bhsd->bhts", qh, kh) + attn_bias
    if key_padding_mask is not None:
        s = s + jnp.where(key_padding_mask, -1e30, 0.0)[:, None, None, :]
    p = jax.nn.softmax(s.astype(jnp.float32), axis=-1)
    o = jnp.einsum("bhts,bhsd->bhtd", p, vh)
    o = (o.transpose(0, 2, 1, 3).reshape(bsz, tgt, H, pos, head_dim)
         .transpose(0, 1, 3, 2, 4).reshape(bsz, tgt, pos, C))
    n = jnp.mean(jnp.sum(o * o, axis=-2, keepdims=True), axis=-1)     # (B, T, 1)
    inv = (n + ln_eps) ** -0.5                                        # (B, T, 1)
    o = o * params["ln_weight"][None, None, None, :] * inv[..., None] # (B, T, 1, 1) bcast
    return jnp.einsum("btpc,oc->btpo", o, params["out_proj_weight"])


if __name__ == "__main__":
    bsz, seq, pos, hidden, head_dim = 2, 8, 3, 32, 8
    num_heads = hidden // head_dim

    key = jax.random.PRNGKey(0)
    kq, kk, kv, kb, kw = jax.random.split(key, 5)

    q = jax.random.normal(kq, (bsz, seq, pos, hidden), jnp.float32)
    k = jax.random.normal(kk, (bsz, seq, pos, hidden), jnp.float32)
    v = jax.random.normal(kv, (bsz, seq, pos, hidden), jnp.float32)
    attn_bias = 0.1 * jax.random.normal(kb, (bsz, num_heads, seq, seq), jnp.float32)
    key_padding_mask = jnp.zeros((bsz, seq), bool).at[1, -2:].set(True)

    # deterministic parameter init (xavier_uniform, gain=1/sqrt(d_tilde)=1; LN weight = ones)
    limit = math.sqrt(6.0 / (hidden + hidden))
    params = {
        "ln_weight": jnp.ones((hidden,), jnp.float32),
        "out_proj_weight": jax.random.uniform(
            kw, (hidden, hidden), jnp.float32, -limit, limit),
    }

    out = equivariant_attention(q, k, v, attn_bias, key_padding_mask, params,
                                head_dim=head_dim)
    out = jax.block_until_ready(out)

    ref = reference(q, k, v, attn_bias, key_padding_mask, params, head_dim=head_dim)
    assert out.shape == (bsz, seq, pos, hidden)
    assert jnp.allclose(out, ref, rtol=2e-3, atol=2e-3), "mismatch vs reference"

    print("KERNEL_OK")
</pallas_src>

<mosaic_0001>
module attributes {stable_mosaic.version = 11 : i64} {
  func.func @_flash_attn_kernel(%arg0: i32, %arg1: i32, %arg2: i32, %arg3: i32, %arg4: memref<1x1x8x24xf32, #tpu.memory_space<vmem>>, %arg5: memref<1x1x8x24xf32, #tpu.memory_space<vmem>>, %arg6: memref<1x1x8x24xf32, #tpu.memory_space<vmem>>, %arg7: memref<1x1x8x8xf32, #tpu.memory_space<vmem>>, %arg8: memref<1x1x8x24xf32, #tpu.memory_space<vmem>>, %arg9: memref<8x1xf32, #tpu.memory_space<vmem>>, %arg10: memref<8x1xf32, #tpu.memory_space<vmem>>, %arg11: memref<8x24xf32, #tpu.memory_space<vmem>>) attributes {dimension_semantics = [#tpu.dimension_semantics<parallel>, #tpu.dimension_semantics<parallel>, #tpu.dimension_semantics<parallel>, #tpu.dimension_semantics<arbitrary>], iteration_bounds = array<i64: 2, 4, 1, 1>, scalar_prefetch = 0 : i64, scratch_operands = 3 : i64, tpu.core_type = #tpu.core_type<tc>, window_params = [{transform_indices = @transform_0, window_bounds = array<i64: 1, 1, 8, 24>}, {transform_indices = @transform_1, window_bounds = array<i64: 1, 1, 8, 24>}, {transform_indices = @transform_2, window_bounds = array<i64: 1, 1, 8, 24>}, {transform_indices = @transform_3, window_bounds = array<i64: 1, 1, 8, 8>}, {transform_indices = @transform_4, window_bounds = array<i64: 1, 1, 8, 24>}]} {
    %c0_i32 = arith.constant 0 : i32
    %0 = arith.cmpi eq, %arg3, %c0_i32 : i32
    %1 = arith.extui %0 : i1 to i32
    %c0_i32_0 = arith.constant 0 : i32
    %2 = arith.cmpi ne, %1, %c0_i32_0 : i32
    scf.if %2 {
      %cst_34 = arith.constant -1.000000e+30 : f32
      %40 = vector.broadcast %cst_34 : f32 to vector<8x1xf32>
      %c0_35 = arith.constant 0 : index
      %c0_36 = arith.constant 0 : index
      %41 = vector.load %arg9[%c0_35, %c0_36] : memref<8x1xf32, #tpu.memory_space<vmem>>, vector<8x1xf32>
      tpu.vector_store %arg9[%c0_35, %c0_36], %40 {strides = array<i32>} : memref<8x1xf32, #tpu.memory_space<vmem>>, vector<8x1xf32>,
      %cst_37 = arith.constant 0.000000e+00 : f32
      %42 = vector.broadcast %cst_37 : f32 to vector<8x1xf32>
      %c0_38 = arith.constant 0 : index
      %c0_39 = arith.constant 0 : index
      %43 = vector.load %arg10[%c0_38, %c0_39] : memref<8x1xf32, #tpu.memory_space<vmem>>, vector<8x1xf32>
      tpu.vector_store %arg10[%c0_38, %c0_39], %42 {strides = array<i32>} : memref<8x1xf32, #tpu.memory_space<vmem>>, vector<8x1xf32>,
      %cst_40 = arith.constant 0.000000e+00 : f32
      %44 = vector.broadcast %cst_40 : f32 to vector<8x24xf32>
      %c0_41 = arith.constant 0 : index
      %c0_42 = arith.constant 0 : index
      %45 = vector.load %arg11[%c0_41, %c0_42] : memref<8x24xf32, #tpu.memory_space<vmem>>, vector<8x24xf32>
      tpu.vector_store %arg11[%c0_41, %c0_42], %44 {strides = array<i32>} : memref<8x24xf32, #tpu.memory_space<vmem>>, vector<8x24xf32>,
    } else {
    }
    %c0 = arith.constant 0 : index
    %c0_1 = arith.constant 0 : index
    %c0_2 = arith.constant 0 : index
    %c0_3 = arith.constant 0 : index
    %3 = vector.load %arg4[%c0, %c0_1, %c0_2, %c0_3] : memref<1x1x8x24xf32, #tpu.memory_space<vmem>>, vector<1x1x8x24xf32>
    %4 = vector.shape_cast %3 : vector<1x1x8x24xf32> to vector<8x24xf32>
    %cst = arith.constant 0.204124153 : f32
    %5 = vector.broadcast %cst : f32 to vector<8x24xf32>
    %6 = arith.mulf %4, %5 : vector<8x24xf32>
    %c0_4 = arith.constant 0 : index
    %c0_5 = arith.constant 0 : index
    %c0_6 = arith.constant 0 : index
    %c0_7 = arith.constant 0 : index
    %7 = vector.load %arg5[%c0_4, %c0_5, %c0_6, %c0_7] : memref<1x1x8x24xf32, #tpu.memory_space<vmem>>, vector<1x1x8x24xf32>
    %8 = vector.shape_cast %7 : vector<1x1x8x24xf32> to vector<8x24xf32>
    %c0_8 = arith.constant 0 : index
    %c0_9 = arith.constant 0 : index
    %c0_10 = arith.constant 0 : index
    %c0_11 = arith.constant 0 : index
    %9 = vector.load %arg6[%c0_8, %c0_9, %c0_10, %c0_11] : memref<1x1x8x24xf32, #tpu.memory_space<vmem>>, vector<1x1x8x24xf32>
    %10 = vector.shape_cast %9 : vector<1x1x8x24xf32> to vector<8x24xf32>
    %cst_12 = arith.constant dense<0.000000e+00> : vector<8x8xf32>
    %11 = tpu.matmul %6, %8, %cst_12 {dimension_numbers = #tpu.dot_dimension_numbers<[1], [1], [0], [0], [0, 0, 1, 0], [], []>} : vector<8x24xf32>, vector<8x24xf32>, vector<8x8xf32> -> vector<8x8xf32>
    %c0_13 = arith.constant 0 : index
    %c0_14 = arith.constant 0 : index
    %c0_15 = arith.constant 0 : index
    %c0_16 = arith.constant 0 : index
    %12 = vector.load %arg7[%c0_13, %c0_14, %c0_15, %c0_16] : memref<1x1x8x8xf32, #tpu.memory_space<vmem>>, vector<1x1x8x8xf32>
    %13 = vector.shape_cast %12 : vector<1x1x8x8xf32> to vector<8x8xf32>
    %14 = arith.addf %11, %13 : vector<8x8xf32>
    %c0_17 = arith.constant 0 : index
    %c0_18 = arith.constant 0 : index
    %15 = vector.load %arg9[%c0_17, %c0_18] : memref<8x1xf32, #tpu.memory_space<vmem>>, vector<8x1xf32>
    %cst_19 = arith.constant dense<0xFF800000> : vector<8xf32>
    %16 = vector.multi_reduction <maximumf>, %14, %cst_19 [1] : vector<8x8xf32> to vector<8xf32>
    %17 = vector.shape_cast %16 : vector<8xf32> to vector<8x1xf32>
    %18 = arith.maximumf %15, %17 : vector<8x1xf32>
    %19 = arith.subf %15, %18 : vector<8x1xf32>
    %20 = math.exp %19 : vector<8x1xf32>
    %21 = vector.broadcast %18 : vector<8x1xf32> to vector<8x8xf32>
    %22 = arith.subf %14, %21 : vector<8x8xf32>
    %23 = math.exp %22 : vector<8x8xf32>
    %c0_20 = arith.constant 0 : index
    %c0_21 = arith.constant 0 : index
    %24 = vector.load %arg10[%c0_20, %c0_21] : memref<8x1xf32, #tpu.memory_space<vmem>>, vector<8x1xf32>
    %25 = arith.mulf %20, %24 : vector<8x1xf32>
    %cst_22 = arith.constant dense<0.000000e+00> : vector<8xf32>
    %26 = vector.multi_reduction <add>, %23, %cst_22 [1] : vector<8x8xf32> to vector<8xf32>
    %27 = vector.shape_cast %26 : vector<8xf32> to vector<8x1xf32>
    %28 = arith.addf %25, %27 : vector<8x1xf32>
    %c0_23 = arith.constant 0 : index
    %c0_24 = arith.constant 0 : index
    %29 = vector.load %arg10[%c0_23, %c0_24] : memref<8x1xf32, #tpu.memory_space<vmem>>, vector<8x1xf32>
    tpu.vector_store %arg10[%c0_23, %c0_24], %28 {strides = array<i32>} : memref<8x1xf32, #tpu.memory_space<vmem>>, vector<8x1xf32>,
    %c0_25 = arith.constant 0 : index
    %c0_26 = arith.constant 0 : index
    %30 = vector.load %arg11[%c0_25, %c0_26] : memref<8x24xf32, #tpu.memory_space<vmem>>, vector<8x24xf32>
    %31 = vector.broadcast %20 : vector<8x1xf32> to vector<8x24xf32>
    %32 = arith.mulf %31, %30 : vector<8x24xf32>
    %cst_27 = arith.constant dense<0.000000e+00> : vector<8x24xf32>
    %33 = tpu.matmul %23, %10, %cst_27 {dimension_numbers = #tpu.dot_dimension_numbers<[1], [0], [0], [1], [0, 0, 1, 1], [], []>} : vector<8x8xf32>, vector<8x24xf32>, vector<8x24xf32> -> vector<8x24xf32>
    %34 = arith.addf %32, %33 : vector<8x24xf32>
    %c0_28 = arith.constant 0 : index
    %c0_29 = arith.constant 0 : index
    %35 = vector.load %arg11[%c0_28, %c0_29] : memref<8x24xf32, #tpu.memory_space<vmem>>, vector<8x24xf32>
    tpu.vector_store %arg11[%c0_28, %c0_29], %34 {strides = array<i32>} : memref<8x24xf32, #tpu.memory_space<vmem>>, vector<8x24xf32>,
    %c0_30 = arith.constant 0 : index
    %c0_31 = arith.constant 0 : index
    %36 = vector.load %arg9[%c0_30, %c0_31] : memref<8x1xf32, #tpu.memory_space<vmem>>, vector<8x1xf32>
    tpu.vector_store %arg9[%c0_30, %c0_31], %18 {strides = array<i32>} : memref<8x1xf32, #tpu.memory_space<vmem>>, vector<8x1xf32>,
    %c0_i32_32 = arith.constant 0 : i32
    %37 = arith.cmpi eq, %arg3, %c0_i32_32 : i32
    %38 = arith.extui %37 : i1 to i32
    %c0_i32_33 = arith.constant 0 : i32
    %39 = arith.cmpi ne, %38, %c0_i32_33 : i32
    scf.if %39 {
      %c0_34 = arith.constant 0 : index
      %c0_35 = arith.constant 0 : index
      %40 = vector.load %arg10[%c0_34, %c0_35] : memref<8x1xf32, #tpu.memory_space<vmem>>, vector<8x1xf32>
      %41 = tpu.reciprocal %40 {approx = true} : vector<8x1xf32> -> vector<8x1xf32>
      %c0_36 = arith.constant 0 : index
      %c0_37 = arith.constant 0 : index
      %42 = vector.load %arg11[%c0_36, %c0_37] : memref<8x24xf32, #tpu.memory_space<vmem>>, vector<8x24xf32>
      %43 = vector.broadcast %41 : vector<8x1xf32> to vector<8x24xf32>
      %44 = arith.mulf %42, %43 : vector<8x24xf32>
      %c0_38 = arith.constant 0 : index
      %c0_39 = arith.constant 0 : index
      %c0_40 = arith.constant 0 : index
      %c0_41 = arith.constant 0 : index
      %45 = vector.load %arg8[%c0_38, %c0_39, %c0_40, %c0_41] : memref<1x1x8x24xf32, #tpu.memory_space<vmem>>, vector<1x1x8x24xf32>
      %46 = vector.shape_cast %45 : vector<1x1x8x24xf32> to vector<8x24xf32>
      %47 = vector.shape_cast %44 : vector<8x24xf32> to vector<1x1x8x24xf32>
      tpu.vector_store %arg8[%c0_38, %c0_39, %c0_40, %c0_41], %47 {strides = array<i32>} : memref<1x1x8x24xf32, #tpu.memory_space<vmem>>, vector<1x1x8x24xf32>,
    } else {
    }
    return
  }
  func.func @transform_0(%arg0: i32, %arg1: i32, %arg2: i32, %arg3: i32) -> (i32, i32, i32, i32) {
    %c0_i32 = arith.constant 0 : i32
    %c0_i32_0 = arith.constant 0 : i32
    return %arg0, %arg1, %arg2, %c0_i32 : i32, i32, i32, i32
  }
  func.func @transform_1(%arg0: i32, %arg1: i32, %arg2: i32, %arg3: i32) -> (i32, i32, i32, i32) {
    %c0_i32 = arith.constant 0 : i32
    %c0_i32_0 = arith.constant 0 : i32
    return %arg0, %arg1, %arg3, %c0_i32 : i32, i32, i32, i32
  }
  func.func @transform_2(%arg0: i32, %arg1: i32, %arg2: i32, %arg3: i32) -> (i32, i32, i32, i32) {
    %c0_i32 = arith.constant 0 : i32
    %c0_i32_0 = arith.constant 0 : i32
    return %arg0, %arg1, %arg3, %c0_i32 : i32, i32, i32, i32
  }
  func.func @transform_3(%arg0: i32, %arg1: i32, %arg2: i32, %arg3: i32) -> (i32, i32, i32, i32) {
    %c0_i32 = arith.constant 0 : i32
    return %arg0, %arg1, %arg2, %arg3 : i32, i32, i32, i32
  }
  func.func @transform_4(%arg0: i32, %arg1: i32, %arg2: i32, %arg3: i32) -> (i32, i32, i32, i32) {
    %c0_i32 = arith.constant 0 : i32
    %c0_i32_0 = arith.constant 0 : i32
    return %arg0, %arg1, %arg2, %c0_i32 : i32, i32, i32, i32
  }
}

</mosaic_0001>

<llo_original>
// kernel: tpu_custom_call.1
$region0: #{tpu_custom_call.1}
  #allocation0 [shape = 'u32[]', space=smem, size = 0x4, offset = 0x4, fixed_abs, tag = 'smem constant byte address 0x4 - core index']
  #allocation1 [shape = 'u32[72,128]{1,0:T(1,128)}', space=vmem, size = 0x9000, scoped, tag = 'internal scratch']
  #allocation2 [shape = 'f32[8,1]{1,0:T(8,128)}', space=vmem, size = 0x1000, scoped, tag = 'scratch operand']
  #allocation3 [shape = 'f32[8,1]{1,0:T(8,128)}', space=vmem, size = 0x1000, scoped, tag = 'scratch operand']
  #allocation4 [shape = 'f32[8,24]{1,0:T(8,128)}', space=vmem, size = 0x1000, scoped, tag = 'scratch operand']
  %s0 = inlined_call_operand.hbm [shape: f32[2,4,8,24], index: 0, kind: input, shape index: {}]
  %s1 = inlined_call_operand.hbm [shape: f32[2,4,8,24], index: 1, kind: input, shape index: {}]
  %s2 = inlined_call_operand.hbm [shape: f32[2,4,8,24], index: 2, kind: input, shape index: {}]
  %s3 = inlined_call_operand.hbm [shape: f32[2,4,8,8], index: 3, kind: input, shape index: {}]
  %s4 = inlined_call_operand.hbm [shape: f32[2,4,8,24], index: 4, kind: output, shape index: {}]
  %s5 = sld [smem:[#allocation0]]
  $region73: #{tpu_custom_call.1} parent=0
    _
  %s7 = ssub.s32 1, %s5
  %s8 = scalar_select 0, %s7, %s5
  $region1: #{tpu_custom_call.1} parent=0
    #allocation5 [shape = 'u8[8192]{0}', space=vmem, size = 0x2000, scoped, tag = 'input window, operand 0']
    #allocation6 [shape = 's32[2]{0}', space=sflag, size = 0x8, scoped, tag = 'scoped memory for tpu_custom_call.1']
    #allocation7 [shape = 's32[2]{0}', space=sflag, size = 0x8, scoped, tag = 'scoped memory for tpu_custom_call.1']
    #allocation8 [shape = 'u8[8192]{0}', space=vmem, size = 0x2000, scoped, tag = 'input window, operand 1']
    #allocation9 [shape = 's32[2]{0}', space=sflag, size = 0x8, scoped, tag = 'scoped memory for tpu_custom_call.1']
    #allocation10 [shape = 'u8[8192]{0}', space=vmem, size = 0x2000, scoped, tag = 'input window, operand 2']
    #allocation11 [shape = 'u8[8192]{0}', space=vmem, size = 0x2000, scoped, tag = 'input window, operand 3']
    #allocation12 [shape = 's32[2]{0}', space=sflag, size = 0x8, scoped, tag = 'scoped memory for tpu_custom_call.1']
    #allocation13 [shape = 'u8[8192]{0}', space=vmem, size = 0x2000, scoped, tag = 'output window, operand 0']
    %9 = vsyncpa [#allocation6], 0
    %s10 = scalar_lea.sflag [#allocation6], 1
    %11 = vsyncpa %s10, 0
    %12 = vsyncpa [#allocation9], 0
    %s13 = scalar_lea.sflag [#allocation9], 1
    %14 = vsyncpa %s13, 0
    %15 = vsyncpa [#allocation12], 0
    %s16 = scalar_lea.sflag [#allocation12], 1
    %17 = vsyncpa %s16, 0
    %18 = vsyncpa [#allocation7], 0
    %s19 = scalar_lea.sflag [#allocation7], 1
    %20 = vsyncpa %s19, 0
    loop: start=0, step=1, limit=10
    $region2: #{tpu_custom_call.1} parent=1 // loop_pre_header
      _
    $region3: #{tpu_custom_call.1} parent=1 // loop_header
      %s22 = sphi 0, %s26
      %p23 = scmp.ge.s32.totalorder %s22, 10
      %s29 = sphi 0, %s55
      %s30 = sphi 0, %s51
      %s31 = sphi 0, %s47
      %s32 = sphi 0, %s43
      %s33 = sphi 0, %s29
      %s34 = sphi 0, %s30
      %s35 = sphi 0, %s31
      %s36 = sphi 0, %s32
      %s37 = sphi 0, %s33
      %s38 = sphi 0, %s34
      %s39 = sphi 0, %s35
      %s40 = sphi 0, %s36
      %s62 = sphi 0, %s64
      %s65 = sphi 0, %s62
      %s66 = sphi 0, %s65
      %s82 = sphi 0, %s66
      %s92 = sphi 0, %s94
      %s95 = sphi 0, %s92
      %s96 = sphi 0, %s95
      %s112 = sphi 0, %s96
      %s122 = sphi 0, %s124
      %s125 = sphi 0, %s122
      %s126 = sphi 0, %s125
      %s142 = sphi 0, %s126
      %s154 = sphi 0, %s156
      %s157 = sphi 0, %s154
      %s158 = sphi 0, %s157
      %s174 = sphi 0, %s158
      %s184 = sphi 0, %s186
      %s187 = sphi 0, %s184
      %s188 = sphi 0, %s187
      %s204 = sphi 0, %s188
    $region4: #{tpu_custom_call.1} parent=1 // loop_header_branch
      %25 = sbr.rel (%p23) target = $region8
    $region5: #{tpu_custom_call.1} parent=1 // loop_body
      %s27 = ssub.s32 %s22, 1
      %s28 = ssub.s32 %s22, 2
      %s41 = sadd.s32 1, %s32
      %p42 = scmp.ge.s32.totalorder %s41, 1
      %s43 = scalar_select %p42, 0, %s41
      %s44 = sadd.s32 1, %s31
      %s45 = scalar_select %p42, %s44, %s31
      %p46 = scmp.ge.s32.totalorder %s45, 1
      %s47 = scalar_select %p46, 0, %s45
      %s48 = sadd.s32 1, %s30
      %s49 = scalar_select %p46, %s48, %s30
      %p50 = scmp.ge.s32.totalorder %s49, 4
      %s51 = scalar_select %p50, 0, %s49
      %s52 = sadd.s32 1, %s29
      %s53 = scalar_select %p50, %s52, %s29
      %p54 = scmp.ge.s32.totalorder %s53, 2
      %s55 = scalar_select %p54, 0, %s53
      %s56 = ssub.s32 %s29, %s55
      %s57 = ssub.s32 %s30, %s51
      %s58 = sor.u32 %s56, %s57
      %s59 = ssub.s32 %s31, %s47
      %s60 = sor.u32 %s58, %s59
      %p61 = scmp.eq.s32.totalorder %s60, 0
      %s63 = sadd.s32 %s62, 1
      %s64 = scalar_select %p61, %s62, %s63
      %p67 = pneg %p61
      %p68 = scmp.eq.s32.totalorder %s22, 7
      %p69 = por %p67, %p68
      %p70 = scmp.ne.s32.totalorder %s62, %s65
      %p71 = scmp.eq.s32.totalorder %s22, 0
      %p72 = por %p70, %p71
      %p73 = scmp.ne.s32.totalorder %s62, %s65
      %p74 = scmp.eq.s32.totalorder %s27, 7
      %p75 = por %p73, %p74
      %p76 = scmp.ne.s32.totalorder %s65, %s66
      %p77 = scmp.eq.s32.totalorder %s27, 0
      %p78 = por %p76, %p77
      %p79 = scmp.ne.s32.totalorder %s65, %s66
      %p80 = scmp.eq.s32.totalorder %s28, 7
      %p81 = por %p79, %p80
      %p83 = scmp.ne.s32.totalorder %s66, %s82
      %p84 = scmp.eq.s32.totalorder %s28, 0
      %p85 = por %p83, %p84
      %s86 = ssub.s32 %s29, %s55
      %s87 = ssub.s32 %s30, %s51
      %s88 = sor.u32 %s86, %s87
      %s89 = ssub.s32 %s32, %s43
      %s90 = sor.u32 %s88, %s89
      %p91 = scmp.eq.s32.totalorder %s90, 0
      %s93 = sadd.s32 %s92, 1
      %s94 = scalar_select %p91, %s92, %s93
      %p97 = pneg %p91
      %p98 = scmp.eq.s32.totalorder %s22, 7
      %p99 = por %p97, %p98
      %p100 = scmp.ne.s32.totalorder %s92, %s95
      %p101 = scmp.eq.s32.totalorder %s22, 0
      %p102 = por %p100, %p101
      %p103 = scmp.ne.s32.totalorder %s92, %s95
      %p104 = scmp.eq.s32.totalorder %s27, 7
      %p105 = por %p103, %p104
      %p106 = scmp.ne.s32.totalorder %s95, %s96
      %p107 = scmp.eq.s32.totalorder %s27, 0
      %p108 = por %p106, %p107
      %p109 = scmp.ne.s32.totalorder %s95, %s96
      %p110 = scmp.eq.s32.totalorder %s28, 7
      %p111 = por %p109, %p110
      %p113 = scmp.ne.s32.totalorder %s96, %s112
      %p114 = scmp.eq.s32.totalorder %s28, 0
      %p115 = por %p113, %p114
      %s116 = ssub.s32 %s29, %s55
      %s117 = ssub.s32 %s30, %s51
      %s118 = sor.u32 %s116, %s117
      %s119 = ssub.s32 %s32, %s43
      %s120 = sor.u32 %s118, %s119
      %p121 = scmp.eq.s32.totalorder %s120, 0
      %s123 = sadd.s32 %s122, 1
      %s124 = scalar_select %p121, %s122, %s123
      %p127 = pneg %p121
      %p128 = scmp.eq.s32.totalorder %s22, 7
      %p129 = por %p127, %p128
      %p130 = scmp.ne.s32.totalorder %s122, %s125
      %p131 = scmp.eq.s32.totalorder %s22, 0
      %p132 = por %p130, %p131
      %p133 = scmp.ne.s32.totalorder %s122, %s125
      %p134 = scmp.eq.s32.totalorder %s27, 7
      %p135 = por %p133, %p134
      %p136 = scmp.ne.s32.totalorder %s125, %s126
      %p137 = scmp.eq.s32.totalorder %s27, 0
      %p138 = por %p136, %p137
      %p139 = scmp.ne.s32.totalorder %s125, %s126
      %p140 = scmp.eq.s32.totalorder %s28, 7
      %p141 = por %p139, %p140
      %p143 = scmp.ne.s32.totalorder %s126, %s142
      %p144 = scmp.eq.s32.totalorder %s28, 0
      %p145 = por %p143, %p144
      %s146 = ssub.s32 %s29, %s55
      %s147 = ssub.s32 %s30, %s51
      %s148 = sor.u32 %s146, %s147
      %s149 = ssub.s32 %s31, %s47
      %s150 = sor.u32 %s148, %s149
      %s151 = ssub.s32 %s32, %s43
      %s152 = sor.u32 %s150, %s151
      %p153 = scmp.eq.s32.totalorder %s152, 0
      %s155 = sadd.s32 %s154, 1
      %s156 = scalar_select %p153, %s154, %s155
      %p159 = pneg %p153
      %p160 = scmp.eq.s32.totalorder %s22, 7
      %p161 = por %p159, %p160
      %p162 = scmp.ne.s32.totalorder %s154, %s157
      %p163 = scmp.eq.s32.totalorder %s22, 0
      %p164 = por %p162, %p163
      %p165 = scmp.ne.s32.totalorder %s154, %s157
      %p166 = scmp.eq.s32.totalorder %s27, 7
      %p167 = por %p165, %p166
      %p168 = scmp.ne.s32.totalorder %s157, %s158
      %p169 = scmp.eq.s32.totalorder %s27, 0
      %p170 = por %p168, %p169
      %p171 = scmp.ne.s32.totalorder %s157, %s158
      %p172 = scmp.eq.s32.totalorder %s28, 7
      %p173 = por %p171, %p172
      %p175 = scmp.ne.s32.totalorder %s158, %s174
      %p176 = scmp.eq.s32.totalorder %s28, 0
      %p177 = por %p175, %p176
      %s178 = ssub.s32 %s29, %s55
      %s179 = ssub.s32 %s30, %s51
      %s180 = sor.u32 %s178, %s179
      %s181 = ssub.s32 %s31, %s47
      %s182 = sor.u32 %s180, %s181
      %p183 = scmp.eq.s32.totalorder %s182, 0
      %s185 = sadd.s32 %s184, 1
      %s186 = scalar_select %p183, %s184, %s185
      %p189 = pneg %p183
      %p190 = scmp.eq.s32.totalorder %s22, 7
      %p191 = por %p189, %p190
      %p192 = scmp.ne.s32.totalorder %s184, %s187
      %p193 = scmp.eq.s32.totalorder %s22, 0
      %p194 = por %p192, %p193
      %p195 = scmp.ne.s32.totalorder %s184, %s187
      %p196 = scmp.eq.s32.totalorder %s27, 7
      %p197 = por %p195, %p196
      %p198 = scmp.ne.s32.totalorder %s187, %s188
      %p199 = scmp.eq.s32.totalorder %s27, 0
      %p200 = por %p198, %p199
      %p201 = scmp.ne.s32.totalorder %s187, %s188
      %p202 = scmp.eq.s32.totalorder %s28, 7
      %p203 = por %p201, %p202
      %p205 = scmp.ne.s32.totalorder %s188, %s204
      %p206 = scmp.eq.s32.totalorder %s28, 0
      %p207 = por %p205, %p206
      %p208 = scmp.le.s32.totalorder 1, %s22
      %p209 = scmp.lt.s32.totalorder %s22, 9
      %p210 = pnand %p208, %p209
      %p211 = pneg %p210
      // Predicated region
      $region9: #{tpu_custom_call.1} parent=5 // pred_check
        _
      $region10: #{tpu_custom_call.1} parent=5 // pred_check_branch
        %213 = sbr.rel (%p210) target = $region12
      $region11: #{tpu_custom_call.1} parent=5 // pred_region
        %s214 = ssub.s32 %s22, 1
      $region12: #{tpu_custom_call.1} parent=5 // pred_fallthru
        _
      %p215 = scmp.lt.s32.totalorder %s22, 8
      // Predicated region
      $region13: #{tpu_custom_call.1} parent=5 // pred_check
        %p216 = pneg %p215
      $region14: #{tpu_custom_call.1} parent=5 // pred_check_branch
        %218 = sbr.rel (%p216) target = $region16
      $region15: #{tpu_custom_call.1} parent=5 // pred_region
        // Predicated region
        $region17: #{tpu_custom_call.1} parent=15 // pred_check
          %p219 = pneg %p72
        $region18: #{tpu_custom_call.1} parent=15 // pred_check_branch
          %221 = sbr.rel (%p219) target = $region20
        $region19: #{tpu_custom_call.1} parent=15 // pred_region
          %s222 = sand.u32 %s62, 1
          %s223 = scalar_lea.sflag [#allocation6], %s222
          %s224 = sand.u32 %s62, 1
          %s225 = smul.addr %s224, 8
          %s226 = scalar_lea.vmem [#allocation5], %s225
          %228 = vsyncadd %s223, 0
          %s229 = sadd.s32 %s31, %s30
          %s230 = smul.addr %s29, 4
          %s231 = sadd.s32 %s229, %s230
          %s232 = smul.addr %s231, 8
          %s233 = scalar_lea.hbm %s0, %s232
          %s235 = sshll.u32 %s233, 4
          %s236 = int_to_ptr.hbm [resolvable:$true] %s235
          %s237 = sshll.u32 %s226, 4
          %s238 = int_to_ptr.vmem [resolvable:$true] %s237
          %240 = dma.hbm_to_vmem [thread:$0]  %s236, 128, %s238, %s223
        $region20: #{tpu_custom_call.1} parent=15 // pred_fallthru
          _
        // Predicated region
        $region21: #{tpu_custom_call.1} parent=15 // pred_check
          %p241 = pneg %p102
        $region22: #{tpu_custom_call.1} parent=15 // pred_check_branch
          %243 = sbr.rel (%p241) target = $region24
        $region23: #{tpu_custom_call.1} parent=15 // pred_region
          %s244 = sand.u32 %s22, 1
          %s245 = scalar_lea.sflag [#allocation9], %s244
          %s246 = sand.u32 %s92, 1
          %s247 = smul.addr %s246, 8
          %s248 = scalar_lea.vmem [#allocation8], %s247
          %250 = vsyncadd %s245, 0
          %s251 = sadd.s32 %s32, %s30
          %s252 = smul.addr %s29, 4
          %s253 = sadd.s32 %s251, %s252
          %s254 = smul.addr %s253, 8
          %s255 = scalar_lea.hbm %s1, %s254
          %s257 = sshll.u32 %s255, 4
          %s258 = int_to_ptr.hbm [resolvable:$true] %s257
          %s259 = sshll.u32 %s248, 4
          %s260 = int_to_ptr.vmem [resolvable:$true] %s259
          %262 = dma.hbm_to_vmem [thread:$0]  %s258, 128, %s260, %s245
        $region24: #{tpu_custom_call.1} parent=15 // pred_fallthru
          _
        // Predicated region
        $region25: #{tpu_custom_call.1} parent=15 // pred_check
          %p263 = pneg %p132
        $region26: #{tpu_custom_call.1} parent=15 // pred_check_branch
          %265 = sbr.rel (%p263) target = $region28
        $region27: #{tpu_custom_call.1} parent=15 // pred_region
          %s266 = sand.u32 %s22, 1
          %s267 = scalar_lea.sflag [#allocation9], %s266
          %s268 = sand.u32 %s122, 1
          %s269 = smul.addr %s268, 8
          %s270 = scalar_lea.vmem [#allocation10], %s269
          %272 = vsyncadd %s267, 0
          %s273 = sadd.s32 %s32, %s30
          %s274 = smul.addr %s29, 4
          %s275 = sadd.s32 %s273, %s274
          %s276 = smul.addr %s275, 8
          %s277 = scalar_lea.hbm %s2, %s276
          %s279 = sshll.u32 %s277, 4
          %s280 = int_to_ptr.hbm [resolvable:$true] %s279
          %s281 = sshll.u32 %s270, 4
          %s282 = int_to_ptr.vmem [resolvable:$true] %s281
          %284 = dma.hbm_to_vmem [thread:$0]  %s280, 128, %s282, %s267
        $region28: #{tpu_custom_call.1} parent=15 // pred_fallthru
          _
        // Predicated region
        $region29: #{tpu_custom_call.1} parent=15 // pred_check
          %p285 = pneg %p164
        $region30: #{tpu_custom_call.1} parent=15 // pred_check_branch
          %287 = sbr.rel (%p285) target = $region32
        $region31: #{tpu_custom_call.1} parent=15 // pred_region
          %s288 = sand.u32 %s154, 1
          %s289 = scalar_lea.sflag [#allocation12], %s288
          %s290 = sand.u32 %s154, 1
          %s291 = smul.addr %s290, 8
          %s292 = scalar_lea.vmem [#allocation11], %s291
          %294 = vsyncadd %s289, 0
          %s295 = sadd.s32 %s32, %s31
          %s296 = sadd.s32 %s295, %s30
          %s297 = smul.addr %s29, 4
          %s298 = sadd.s32 %s296, %s297
          %s299 = smul.addr %s298, 8
          %s300 = scalar_lea.hbm %s3, %s299
          %s302 = sshll.u32 %s300, 4
          %s303 = int_to_ptr.hbm [resolvable:$true] %s302
          %s304 = sshll.u32 %s292, 4
          %s305 = int_to_ptr.vmem [resolvable:$true] %s304
          %307 = dma.hbm_to_vmem [thread:$0]  %s303, 128, %s305, %s289
        $region32: #{tpu_custom_call.1} parent=15 // pred_fallthru
          _
      $region16: #{tpu_custom_call.1} parent=5 // pred_fallthru
        _
      %p308 = scmp.le.s32.totalorder 1, %s22
      %p309 = scmp.lt.s32.totalorder %s22, 9
      %p310 = pnand %p308, %p309
      %p311 = pneg %p310
      // Predicated region
      $region33: #{tpu_custom_call.1} parent=5 // pred_check
        _
      $region34: #{tpu_custom_call.1} parent=5 // pred_check_branch
        %313 = sbr.rel (%p310) target = $region36
      $region35: #{tpu_custom_call.1} parent=5 // pred_region
        %s314 = ssub.s32 %s22, 1
        %s315 = sand.u32 %s65, 1
        %s316 = scalar_lea.sflag [#allocation6], %s315
        %s317 = sand.u32 %s65, 1
        %s318 = smul.addr %s317, 8
        %s319 = scalar_lea.vmem [#allocation5], %s318
        // Predicated region
        $region37: #{tpu_custom_call.1} parent=35 // pred_check
          %p320 = pneg %p78
        $region38: #{tpu_custom_call.1} parent=35 // pred_check_branch
          %322 = sbr.rel (%p320) target = $region40
        $region39: #{tpu_custom_call.1} parent=35 // pred_region
          %324 = dma.done %s316, 128
        $region40: #{tpu_custom_call.1} parent=35 // pred_fallthru
          _
        %s325 = sand.u32 %s27, 1
        %s326 = scalar_lea.sflag [#allocation9], %s325
        %s327 = sand.u32 %s95, 1
        %s328 = smul.addr %s327, 8
        %s329 = scalar_lea.vmem [#allocation8], %s328
        // Predicated region
        $region41: #{tpu_custom_call.1} parent=35 // pred_check
          %p330 = pneg %p108
        $region42: #{tpu_custom_call.1} parent=35 // pred_check_branch
          %332 = sbr.rel (%p330) target = $region44
        $region43: #{tpu_custom_call.1} parent=35 // pred_region
          %334 = dma.done %s326, 128
        $region44: #{tpu_custom_call.1} parent=35 // pred_fallthru
          _
        %s335 = sand.u32 %s27, 1
        %s336 = scalar_lea.sflag [#allocation9], %s335
        %s337 = sand.u32 %s125, 1
        %s338 = smul.addr %s337, 8
        %s339 = scalar_lea.vmem [#allocation10], %s338
        // Predicated region
        $region45: #{tpu_custom_call.1} parent=35 // pred_check
          %p340 = pneg %p138
        $region46: #{tpu_custom_call.1} parent=35 // pred_check_branch
          %342 = sbr.rel (%p340) target = $region48
        $region47: #{tpu_custom_call.1} parent=35 // pred_region
          %344 = dma.done %s336, 128
        $region48: #{tpu_custom_call.1} parent=35 // pred_fallthru
          _
        %s345 = sand.u32 %s157, 1
        %s346 = scalar_lea.sflag [#allocation12], %s345
        %s347 = sand.u32 %s157, 1
        %s348 = smul.addr %s347, 8
        %s349 = scalar_lea.vmem [#allocation11], %s348
        // Predicated region
        $region49: #{tpu_custom_call.1} parent=35 // pred_check
          %p350 = pneg %p170
        $region50: #{tpu_custom_call.1} parent=35 // pred_check_branch
          %352 = sbr.rel (%p350) target = $region52
        $region51: #{tpu_custom_call.1} parent=35 // pred_region
          %354 = dma.done %s346, 128
        $region52: #{tpu_custom_call.1} parent=35 // pred_fallthru
          _
        %s355 = sand.u32 %s65, 1
        %s356 = scalar_lea.sflag [#allocation6], %s355
        %s357 = sand.u32 %s65, 1
        %s358 = smul.addr %s357, 8
        %s359 = scalar_lea.vmem [#allocation5], %s358
        %p360 = pneg %p78
        %p361 = pneg %p75
        %s362 = sand.u32 %s27, 1
        %s363 = scalar_lea.sflag [#allocation9], %s362
        %s364 = sand.u32 %s95, 1
        %s365 = smul.addr %s364, 8
        %s366 = scalar_lea.vmem [#allocation8], %s365
        %p367 = pneg %p108
        %p368 = pneg %p105
        %s369 = sand.u32 %s27, 1
        %s370 = scalar_lea.sflag [#allocation9], %s369
        %s371 = sand.u32 %s125, 1
        %s372 = smul.addr %s371, 8
        %s373 = scalar_lea.vmem [#allocation10], %s372
        %p374 = pneg %p138
        %p375 = pneg %p135
        %s376 = sand.u32 %s157, 1
        %s377 = scalar_lea.sflag [#allocation12], %s376
        %s378 = sand.u32 %s157, 1
        %s379 = smul.addr %s378, 8
        %s380 = scalar_lea.vmem [#allocation11], %s379
        %p381 = pneg %p170
        %p382 = pneg %p167
        %p383 = pneg %p200
        %p384 = pneg %p197
        %s385 = sand.u32 %s187, 1
        %s386 = scalar_lea.sflag [#allocation7], %s385
        %s387 = sand.u32 %s187, 1
        %s388 = smul.addr %s387, 8
        %s389 = scalar_lea.vmem [#allocation13], %s388
        %p390 = scmp.eq.s32.totalorder %s36, 0
        // Predicated region
        $region53: #{tpu_custom_call.1} parent=35 // pred_check
          %p391 = pneg %p390
        $region54: #{tpu_custom_call.1} parent=35 // pred_check_branch
          %393 = sbr.rel (%p391) target = $region56
        $region55: #{tpu_custom_call.1} parent=35 // pred_region
          %vm394 = vcmask 7168
          %395 = vst.msk [vmem:[#allocation2] sm:$0xff] %vm394, -1e+30
          %396 = vst.msk [vmem:[#allocation3] sm:$0xff] %vm394, 0.0
          %vm397 = vcmask 195584
          %398 = vst.msk [vmem:[#allocation4] sm:$0xff] %vm397, 0.0
        $region56: #{tpu_custom_call.1} parent=35 // pred_fallthru
          _
        %v399 = vld [vmem:[%s319] sm:$0xff]
        %v400 = vmul.f32 %v399, 0.20412415
        %v401 = vld [vmem:[%s329] sm:$0xff]
        %v402 = vld [vmem:[%s339] sm:$0xff]
        %v403 = vld [vmem:[%s349] sm:$0xff]
        %vm404 = vcmask 195584
        %v406 = vsel %vm404, %v400, 0
        %v409 = vsel %vm404, %v401, 0
        %411 = vmatpush.xpose.msra.mxu0 0.0
        %412 = vmatpush.xpose.msra.mxu0 0.0
        %413 = vmatpush.xpose.msra.mxu0 0.0
        %414 = vmatpush.xpose.msra.mxu0 0.0
        %415 = vmatpush.xpose.msra.mxu0 0.0
        %416 = vmatpush.xpose.msra.mxu0 0.0
        %417 = vmatpush.xpose.msra.mxu0 0.0
        %418 = vmatpush.xpose.msra.mxu0 0.0
        %419 = vmatpush.xpose.msra.mxu0 0.0
        %420 = vmatpush.xpose.msra.mxu0 0.0
        %421 = vmatpush.xpose.msra.mxu0 0.0
        %422 = vmatpush.xpose.msra.mxu0 0.0
        %423 = vmatpush.xpose.msra.mxu0 0.0
        %424 = vmatpush.xpose.msra.mxu0 0.0
        %425 = vmatpush.xpose.msra.mxu0 0.0
        %426 = vmatpush.xpose.msra.mxu0 %v409
        %427 = vmatmul.f32.gmra.mxu0 %v406
        %v428 = vpop.f32.mrf.mxu0
        %v429 = vadd.f32 %v403, %v428
        %430 = vdwg.mxu0
        %v431 = vld [vmem:[#allocation2] sm:$0xff]
        %vm432 = vcmask 64512
        %v433 = vsel %vm432, %v429, -inf
        %434 = vmax.xlane.f32.xlu0 %v433
        %v435 = vpop.xlane.xlu0 %434
        %v436 = vmax.f32 %v431, %v435
        %v437 = vsub.f32 %v431, %v436
        %v438 = vmul.f32 %v437, 1.442695
        %v439 = vpow.pop %v438
        %441 = vset.pattern.permute.xlu0 0
        %442 = vperm.xlu0 %441, %v436
        %v443 = vpop.permute.xlu0 %442
        %v445 = vsub.f32 %v429, %v443
        %v446 = vmul.f32 %v445, 1.442695
        %v447 = vpow.pop %v446
        %v448 = vld [vmem:[#allocation3] sm:$0xff]
        %v449 = vmul.f32 %v439, %v448
        %v450 = vsel %vm432, %v447, 0.0
        %451 = vadd.xlane.f32.xlu0 %v450
        %v452 = vpop.xlane.xlu0 %451
        %v453 = vadd.f32 %v449, %v452
        %vm454 = vcmask 7168
        %455 = vst.msk [vmem:[#allocation3] sm:$0xff] %vm454, %v453
        %v456 = vld [vmem:[#allocation4] sm:$0xff]
        %458 = vset.pattern.permute.xlu0 0
        %459 = vperm.xlu0 %458, %v439
        %v460 = vpop.permute.xlu0 %459
        %v462 = vmul.f32 %v460, %v456
        %v464 = vsel %vm432, %v447, 0
        %466 = vmatpush.msra.mxu0 0.0
        %467 = vmatpush.msra.mxu0 0.0
        %468 = vmatpush.msra.mxu0 0.0
        %469 = vmatpush.msra.mxu0 0.0
        %470 = vmatpush.msra.mxu0 0.0
        %471 = vmatpush.msra.mxu0 0.0
        %472 = vmatpush.msra.mxu0 0.0
        %473 = vmatpush.msra.mxu0 0.0
        %474 = vmatpush.msra.mxu0 0.0
        %475 = vmatpush.msra.mxu0 0.0
        %476 = vmatpush.msra.mxu0 0.0
        %477 = vmatpush.msra.mxu0 0.0
        %478 = vmatpush.msra.mxu0 0.0
        %479 = vmatpush.msra.mxu0 0.0
        %480 = vmatpush.msra.mxu0 0.0
        %481 = vmatpush.msra.mxu0 %v402
        %482 = vmatmul.f32.gmra.mxu0 %v464
        %v483 = vpop.f32.mrf.mxu0
        %v484 = vadd.f32 0.0, %v483
        %485 = vdwg.mxu0
        %v486 = vadd.f32 %v462, %v484
        %487 = vst.msk [vmem:[#allocation4] sm:$0xff] %vm404, %v486
        %488 = vst.msk [vmem:[#allocation2] sm:$0xff] %vm454, %v436
        // Predicated region
        $region57: #{tpu_custom_call.1} parent=35 // pred_check
          %p489 = pneg %p390
        $region58: #{tpu_custom_call.1} parent=35 // pred_check_branch
          %491 = sbr.rel (%p489) target = $region60
        $region59: #{tpu_custom_call.1} parent=35 // pred_region
          %v492 = vld [vmem:[#allocation3] sm:$0xff]
          %v493 = vrcp.pop %v492
          %v494 = vld [vmem:[#allocation4] sm:$0xff]
          %496 = vset.pattern.permute.xlu0 0
          %497 = vperm.xlu0 %496, %v493
          %v498 = vpop.permute.xlu0 %497
          %v500 = vmul.f32 %v494, %v498
          %501 = vst.msk [vmem:[%s389] sm:$0xff] %vm404, %v500
        $region60: #{tpu_custom_call.1} parent=35 // pred_fallthru
          _
        %s502 = sand.u32 %s187, 1
        %s503 = scalar_lea.sflag [#allocation7], %s502
        %s504 = sand.u32 %s187, 1
        %s505 = smul.addr %s504, 8
        %s506 = scalar_lea.vmem [#allocation13], %s505
        // Predicated region
        $region61: #{tpu_custom_call.1} parent=35 // pred_check
          %p507 = pneg %p197
        $region62: #{tpu_custom_call.1} parent=35 // pred_check_branch
          %509 = sbr.rel (%p507) target = $region64
        $region63: #{tpu_custom_call.1} parent=35 // pred_region
          %511 = vsyncadd %s503, 0
          %s512 = sadd.s32 %s35, %s34
          %s513 = smul.addr %s33, 4
          %s514 = sadd.s32 %s512, %s513
          %s515 = smul.addr %s514, 8
          %s516 = scalar_lea.hbm %s4, %s515
          %s518 = sshll.u32 %s506, 4
          %s519 = int_to_ptr.vmem [resolvable:$true] %s518
          %s520 = sshll.u32 %s516, 4
          %s521 = int_to_ptr.hbm [resolvable:$true] %s520
          %523 = dma.vmem_to_hbm [thread:$0]  %s519, 128, %s521, %s503
        $region64: #{tpu_custom_call.1} parent=35 // pred_fallthru
          _
      $region36: #{tpu_custom_call.1} parent=5 // pred_fallthru
        _
      %p524 = scmp.le.s32.totalorder 2, %s22
      // Predicated region
      $region65: #{tpu_custom_call.1} parent=5 // pred_check
        %p525 = pneg %p524
      $region66: #{tpu_custom_call.1} parent=5 // pred_check_branch
        %527 = sbr.rel (%p525) target = $region68
      $region67: #{tpu_custom_call.1} parent=5 // pred_region
        %s528 = ssub.s32 %s22, 2
        // Predicated region
        $region69: #{tpu_custom_call.1} parent=67 // pred_check
          %p529 = pneg %p203
        $region70: #{tpu_custom_call.1} parent=67 // pred_check_branch
          %531 = sbr.rel (%p529) target = $region72
        $region71: #{tpu_custom_call.1} parent=67 // pred_region
          %s532 = sand.u32 %s188, 1
          %s533 = scalar_lea.sflag [#allocation7], %s532
          %s534 = sand.u32 %s188, 1
          %s535 = smul.addr %s534, 8
          %s536 = scalar_lea.vmem [#allocation13], %s535
          %538 = dma.done %s533, 128
        $region72: #{tpu_custom_call.1} parent=67 // pred_fallthru
          _
      $region68: #{tpu_custom_call.1} parent=5 // pred_fallthru
        _
    $region6: #{tpu_custom_call.1} parent=1 // loop_footer
      %s26 = sadd.s32 1, %s22
    $region7: #{tpu_custom_call.1} parent=1 // loop_footer_branch
      %21 = sbr.rel target = $region3
    $region8: #{tpu_custom_call.1} parent=1 // loop_exit
      _
    %539 = vsyncpa [#allocation6], 1
    %s540 = scalar_lea.sflag [#allocation6], 1
    %541 = vsyncpa %s540, 1
    %542 = vsyncpa [#allocation9], 1
    %s543 = scalar_lea.sflag [#allocation9], 1
    %544 = vsyncpa %s543, 1
    %545 = vsyncpa [#allocation12], 1
    %s546 = scalar_lea.sflag [#allocation12], 1
    %547 = vsyncpa %s546, 1
    %548 = vsyncpa [#allocation7], 1
    %s549 = scalar_lea.sflag [#allocation7], 1
    %550 = vsyncpa %s549, 1

</llo_original>
